<compile_context>
chip_gen: v6e
topology: v6e:2x2x1
jax: 0.10.0
libtpu: 0.0.40
codegen_flags: <defaults>
</compile_context>

<pallas_src>
import functools

import jax
import jax.numpy as jnp
from jax.experimental import pallas as pl
from jax.experimental.pallas import tpu as pltpu

LANE = 128   # lane width (last-dim tile)
SUB = 8      # sublane width (second-to-last-dim tile)


def _round_up(x, m):
    return (x + m - 1) // m * m


def _leaky_relu(x, slope=0.01):
    # torch.nn.LeakyReLU default negative_slope = 0.01
    return jnp.where(x >= 0, x, slope * x)


def _softplus(x):
    # torch.nn.Softplus default (beta=1, threshold=20): linear for x > 20
    return jnp.where(x > 20.0, x, jnp.log1p(jnp.exp(jnp.minimum(x, 20.0))))


def actor_kernel(x_ref, p_ref, out_ref, *, action_bound, action_dim,
                 state_dim, k0r, a2r, offs):
    """x_ref:  [tb, state_dim] state tile (unpadded last dim)
       p_ref:  [R, 128] packed params slab (resident across grid steps)
       out_ref:[a2r, tb] transposed output slab (row [0:A)=mu, [A:2A)=std)."""
    o_w1, o_b1, o_w2, o_b2, o_w3, o_b3, o_w45t, o_b45t = offs

    x = x_ref[...]                                            # [tb, state_dim]
    if k0r != state_dim:
        # Zero-extend K to the sublane-aligned slab row count (trace-time only;
        # no-op when state_dim is already a multiple of 8).
        x = jnp.concatenate(
            [x, jnp.zeros((x.shape[0], k0r - state_dim), x.dtype)], axis=1)

    # fc1: Linear(state_dim, 64) + LeakyReLU (padded to 128 lanes; pad cols stay 0)
    w1 = p_ref[pl.ds(o_w1, k0r), :]                           # [k0r, 128]
    b1 = p_ref[pl.ds(o_b1, 1), :]                             # [1, 128]
    h = _leaky_relu(jnp.dot(x, w1, preferred_element_type=jnp.float32) + b1)

    # fc2: Linear(64, 32) + LeakyReLU
    w2 = p_ref[pl.ds(o_w2, LANE), :]                          # [128, 128]
    b2 = p_ref[pl.ds(o_b2, 1), :]
    h = _leaky_relu(jnp.dot(h, w2, preferred_element_type=jnp.float32) + b2)

    # fc3: Linear(32, 16) + LeakyReLU
    w3 = p_ref[pl.ds(o_w3, LANE), :]                          # [128, 128]
    b3 = p_ref[pl.ds(o_b3, 1), :]
    h = _leaky_relu(jnp.dot(h, w3, preferred_element_type=jnp.float32) + b3)

    # Fused, transposed heads: zT[o, b] = sum_k W45T[o, k] * h[b, k]
    # (A·Bᵀ contraction over the last dims — MXU-native, no explicit transpose).
    w45t = p_ref[pl.ds(o_w45t, a2r), :]                       # [a2r, 128]
    b45t = p_ref[pl.ds(o_b45t, a2r), :][:, 0:1]               # [a2r, 1]
    zt = jax.lax.dot_general(
        w45t, h, (((1,), (1,)), ((), ())),
        preferred_element_type=jnp.float32) + b45t            # [a2r, tb]

    # Row-wise activation: tanh*bound on mu rows, softplus on std rows.
    row = jax.lax.broadcasted_iota(jnp.int32, zt.shape, 0)
    out = jnp.where(row < action_dim, jnp.tanh(zt) * action_bound, _softplus(zt))

    out_ref[...] = out.astype(out_ref.dtype)


def pack_params(params, state_dim):
    """Fuse + transpose the head weights and pack everything into one [R, 128]
    f32 slab.  Call ONCE per parameter update (hoisted out of the forward).

    Every sub-block is zero-padded to 128 lanes and to a multiple-of-8 row
    count, so in-kernel slices are tile-aligned views and the zero padding
    flows through the matmuls without changing results."""
    action_dim = params["w4"].shape[1]
    k0r = _round_up(max(state_dim, 1), SUB)       # fc1 contraction rows
    a2r = _round_up(2 * action_dim, SUB)          # transposed head output rows

    w45t = jnp.concatenate([params["w4"], params["w5"]], axis=1).T   # [2A, 16]
    b45t = jnp.concatenate([params["b4"], params["b5"]], axis=1).T   # [2A, 1]

    def pad_block(a, rows):
        r, c = a.shape
        return jnp.pad(a.astype(jnp.float32), ((0, rows - r), (0, LANE - c)))

    blocks = [
        pad_block(params["w1"], k0r),     # w1   -> [k0r, 128]
        pad_block(params["b1"], SUB),     # b1   -> [8, 128]   (row 0 used)
        pad_block(params["w2"], LANE),    # w2   -> [128, 128]
        pad_block(params["b2"], SUB),
        pad_block(params["w3"], LANE),    # w3   -> [128, 128]
        pad_block(params["b3"], SUB),
        pad_block(w45t, a2r),             # w45T -> [a2r, 128] (16-wide contraction)
        pad_block(b45t, a2r),             # b45T -> [a2r, 128] (col 0 holds bias)
    ]
    offs = []
    row = 0
    for blk in blocks:
        offs.append(row)
        row += blk.shape[0]
    slab = jnp.concatenate(blocks, axis=0)        # [R, 128]
    return slab, tuple(offs), k0r, a2r


def _pick_tb(B, max_tb=1024):
    """Batch tile: single block for small batches; otherwise a multiple of 128
    (keeps lane-dense output blocks) capped so large batches get >=2 grid steps
    (megacore sharding on v7x).  VMEM stays tiny at these sizes."""
    if B <= 256:
        return B
    return min(max_tb, _round_up(pl.cdiv(B, 2), LANE))


def actor_forward(state, slab, offs, *, state_dim, action_dim, action_bound,
                  k0r, a2r, tb=None):
    """state: [B, state_dim] f32; slab/offs/k0r/a2r from pack_params."""
    B = state.shape[0]
    if tb is None:
        tb = _pick_tb(B)
    grid = pl.cdiv(B, tb)

    kernel = functools.partial(
        actor_kernel,
        action_bound=float(action_bound),
        action_dim=int(action_dim),
        state_dim=int(state_dim),
        k0r=int(k0r),
        a2r=int(a2r),
        offs=offs,
    )

    out = pl.pallas_call(
        kernel,
        grid=(grid,),
        in_specs=[
            pl.BlockSpec((tb, state_dim), lambda i: (i, 0)),   # unpadded state tile
            pl.BlockSpec(slab.shape, lambda i: (0, 0)),        # resident weight slab
        ],
        out_specs=pl.BlockSpec((a2r, tb), lambda i: (0, i)),   # transposed mu||std
        out_shape=jax.ShapeDtypeStruct((a2r, B), jnp.float32),
        compiler_params=pltpu.CompilerParams(
            dimension_semantics=("parallel",),  # batch axis: shard across TCs (v7x)
        ),
    )(state.astype(jnp.float32), slab)

    mu = out[:action_dim, :].T                      # [B, A]
    std = out[action_dim:2 * action_dim, :].T       # [B, A]
    return mu, std


def init_params(key, state_dim, action_dim):
    """Deterministic synthetic weights (uniform, PyTorch-style fan_in scaling)."""
    sizes = [(state_dim, 64), (64, 32), (32, 16), (16, action_dim), (16, action_dim)]
    params = {}
    keys = jax.random.split(key, 2 * len(sizes))
    for i, (fan_in, fan_out) in enumerate(sizes):
        bound = 1.0 / jnp.sqrt(fan_in)
        params[f"w{i+1}"] = jax.random.uniform(
            keys[2 * i], (fan_in, fan_out), jnp.float32, -bound, bound
        )
        params[f"b{i+1}"] = jax.random.uniform(
            keys[2 * i + 1], (1, fan_out), jnp.float32, -bound, bound
        )
    return params


def reference_forward(state, params, action_bound):
    """Plain-JAX reference of the PyTorch forward."""
    h = _leaky_relu(state @ params["w1"] + params["b1"])
    h = _leaky_relu(h @ params["w2"] + params["b2"])
    h = _leaky_relu(h @ params["w3"] + params["b3"])
    mu = jnp.tanh(h @ params["w4"] + params["b4"]) * action_bound
    std = _softplus(h @ params["w5"] + params["b5"])
    return mu, std


if __name__ == "__main__":
    key = jax.random.PRNGKey(0)
    k_param, k_state = jax.random.split(key)

    batch = 8
    state_dim = 32
    action_dim = 4
    action_bound = 2.0

    params = init_params(k_param, state_dim, action_dim)
    state = jax.random.normal(k_state, (batch, state_dim), jnp.float32)

    # Pack the weight slab ONCE (per parameter update), outside the forward path.
    slab, offs, k0r, a2r = pack_params(params, state_dim)

    mu, std = actor_forward(
        state, slab, offs,
        state_dim=state_dim, action_dim=action_dim, action_bound=action_bound,
        k0r=k0r, a2r=a2r,
    )
    jax.block_until_ready((mu, std))

    mu_ref, std_ref = reference_forward(state, params, action_bound)
    assert mu.shape == mu_ref.shape and std.shape == std_ref.shape
    assert jnp.allclose(mu, mu_ref, atol=1e-5, rtol=1e-5), "mu mismatch"
    assert jnp.allclose(std, std_ref, atol=1e-5, rtol=1e-5), "std mismatch"

    print("KERNEL_OK")
</pallas_src>

<mosaic_0001>
module attributes {stable_mosaic.version = 11 : i64} {
  func.func @actor_kernel(%arg0: i32, %arg1: memref<8x32xf32, #tpu.memory_space<vmem>>, %arg2: memref<328x128xf32, #tpu.memory_space<vmem>>, %arg3: memref<8x8xf32, #tpu.memory_space<vmem>>) attributes {dimension_semantics = [#tpu.dimension_semantics<parallel>], iteration_bounds = array<i64: 1>, scalar_prefetch = 0 : i64, scratch_operands = 0 : i64, tpu.core_type = #tpu.core_type<tc>, window_params = [{transform_indices = @transform_0, window_bounds = array<i64: 8, 32>}, {pipeline_mode = #tpu.pipeline_mode<synchronous>, transform_indices = @transform_1, window_bounds = array<i64: 328, 128>}, {transform_indices = @transform_2, window_bounds = array<i64: 8, 8>}]} {
    %c0 = arith.constant 0 : index
    %c0_0 = arith.constant 0 : index
    %0 = vector.load %arg1[%c0, %c0_0] : memref<8x32xf32, #tpu.memory_space<vmem>>, vector<8x32xf32>
    %c0_1 = arith.constant 0 : index
    %c0_2 = arith.constant 0 : index
    %1 = vector.load %arg2[%c0_1, %c0_2] : memref<328x128xf32, #tpu.memory_space<vmem>>, vector<32x128xf32>
    %c32 = arith.constant 32 : index
    %c0_3 = arith.constant 0 : index
    %2 = vector.load %arg2[%c32, %c0_3] : memref<328x128xf32, #tpu.memory_space<vmem>>, vector<1x128xf32>
    %cst = arith.constant dense<0.000000e+00> : vector<8x128xf32>
    %3 = tpu.matmul %0, %1, %cst {dimension_numbers = #tpu.dot_dimension_numbers<[1], [0], [0], [1], [0, 0, 1, 1], [], []>} : vector<8x32xf32>, vector<32x128xf32>, vector<8x128xf32> -> vector<8x128xf32>
    %4 = vector.broadcast %2 : vector<1x128xf32> to vector<8x128xf32>
    %5 = arith.addf %3, %4 : vector<8x128xf32>
    %cst_4 = arith.constant 0.000000e+00 : f32
    %6 = vector.broadcast %cst_4 : f32 to vector<8x128xf32>
    %7 = arith.cmpf oge, %5, %6 : vector<8x128xf32>
    %cst_5 = arith.constant 0.00999999977 : f32
    %8 = vector.broadcast %cst_5 : f32 to vector<8x128xf32>
    %9 = arith.mulf %8, %5 : vector<8x128xf32>
    %10 = arith.select %7, %5, %9 : vector<8x128xi1>, vector<8x128xf32>
    %c40 = arith.constant 40 : index
    %c0_6 = arith.constant 0 : index
    %11 = vector.load %arg2[%c40, %c0_6] : memref<328x128xf32, #tpu.memory_space<vmem>>, vector<128x128xf32>
    %c168 = arith.constant 168 : index
    %c0_7 = arith.constant 0 : index
    %12 = vector.load %arg2[%c168, %c0_7] : memref<328x128xf32, #tpu.memory_space<vmem>>, vector<1x128xf32>
    %cst_8 = arith.constant dense<0.000000e+00> : vector<8x128xf32>
    %13 = tpu.matmul %10, %11, %cst_8 {dimension_numbers = #tpu.dot_dimension_numbers<[1], [0], [0], [1], [0, 0, 1, 1], [], []>} : vector<8x128xf32>, vector<128x128xf32>, vector<8x128xf32> -> vector<8x128xf32>
    %14 = vector.broadcast %12 : vector<1x128xf32> to vector<8x128xf32>
    %15 = arith.addf %13, %14 : vector<8x128xf32>
    %cst_9 = arith.constant 0.000000e+00 : f32
    %16 = vector.broadcast %cst_9 : f32 to vector<8x128xf32>
    %17 = arith.cmpf oge, %15, %16 : vector<8x128xf32>
    %cst_10 = arith.constant 0.00999999977 : f32
    %18 = vector.broadcast %cst_10 : f32 to vector<8x128xf32>
    %19 = arith.mulf %18, %15 : vector<8x128xf32>
    %20 = arith.select %17, %15, %19 : vector<8x128xi1>, vector<8x128xf32>
    %c176 = arith.constant 176 : index
    %c0_11 = arith.constant 0 : index
    %21 = vector.load %arg2[%c176, %c0_11] : memref<328x128xf32, #tpu.memory_space<vmem>>, vector<128x128xf32>
    %c304 = arith.constant 304 : index
    %c0_12 = arith.constant 0 : index
    %22 = vector.load %arg2[%c304, %c0_12] : memref<328x128xf32, #tpu.memory_space<vmem>>, vector<1x128xf32>
    %cst_13 = arith.constant dense<0.000000e+00> : vector<8x128xf32>
    %23 = tpu.matmul %20, %21, %cst_13 {dimension_numbers = #tpu.dot_dimension_numbers<[1], [0], [0], [1], [0, 0, 1, 1], [], []>} : vector<8x128xf32>, vector<128x128xf32>, vector<8x128xf32> -> vector<8x128xf32>
    %24 = vector.broadcast %22 : vector<1x128xf32> to vector<8x128xf32>
    %25 = arith.addf %23, %24 : vector<8x128xf32>
    %cst_14 = arith.constant 0.000000e+00 : f32
    %26 = vector.broadcast %cst_14 : f32 to vector<8x128xf32>
    %27 = arith.cmpf oge, %25, %26 : vector<8x128xf32>
    %cst_15 = arith.constant 0.00999999977 : f32
    %28 = vector.broadcast %cst_15 : f32 to vector<8x128xf32>
    %29 = arith.mulf %28, %25 : vector<8x128xf32>
    %30 = arith.select %27, %25, %29 : vector<8x128xi1>, vector<8x128xf32>
    %c312 = arith.constant 312 : index
    %c0_16 = arith.constant 0 : index
    %31 = vector.load %arg2[%c312, %c0_16] : memref<328x128xf32, #tpu.memory_space<vmem>>, vector<8x128xf32>
    %c320 = arith.constant 320 : index
    %c0_17 = arith.constant 0 : index
    %32 = vector.load %arg2[%c320, %c0_17] : memref<328x128xf32, #tpu.memory_space<vmem>>, vector<8x128xf32>
    %33 = vector.extract_strided_slice %32 {offsets = [0, 0], sizes = [8, 1], strides = [1, 1]} : vector<8x128xf32> to vector<8x1xf32>
    %cst_18 = arith.constant dense<0.000000e+00> : vector<8x8xf32>
    %34 = tpu.matmul %31, %30, %cst_18 {dimension_numbers = #tpu.dot_dimension_numbers<[1], [1], [0], [0], [0, 0, 1, 0], [], []>} : vector<8x128xf32>, vector<8x128xf32>, vector<8x8xf32> -> vector<8x8xf32>
    %35 = vector.broadcast %33 : vector<8x1xf32> to vector<8x8xf32>
    %36 = arith.addf %34, %35 : vector<8x8xf32>
    %37 = tpu.iota {dimensions = array<i32: 0>} : vector<8x8xi32>
    %c4_i32 = arith.constant 4 : i32
    %38 = vector.broadcast %c4_i32 : i32 to vector<8x8xi32>
    %39 = arith.cmpi slt, %37, %38 : vector<8x8xi32>
    %40 = math.tanh %36 : vector<8x8xf32>
    %cst_19 = arith.constant 2.000000e+00 : f32
    %41 = vector.broadcast %cst_19 : f32 to vector<8x8xf32>
    %42 = arith.mulf %40, %41 : vector<8x8xf32>
    %cst_20 = arith.constant 2.000000e+01 : f32
    %43 = vector.broadcast %cst_20 : f32 to vector<8x8xf32>
    %44 = arith.cmpf ogt, %36, %43 : vector<8x8xf32>
    %cst_21 = arith.constant 2.000000e+01 : f32
    %45 = vector.broadcast %cst_21 : f32 to vector<8x8xf32>
    %46 = arith.minimumf %36, %45 : vector<8x8xf32>
    %47 = math.exp %46 : vector<8x8xf32>
    %48 = math.log1p %47 : vector<8x8xf32>
    %49 = arith.select %44, %36, %48 : vector<8x8xi1>, vector<8x8xf32>
    %50 = arith.select %39, %42, %49 : vector<8x8xi1>, vector<8x8xf32>
    %c0_22 = arith.constant 0 : index
    %c0_23 = arith.constant 0 : index
    %51 = vector.load %arg3[%c0_22, %c0_23] : memref<8x8xf32, #tpu.memory_space<vmem>>, vector<8x8xf32>
    tpu.vector_store %arg3[%c0_22, %c0_23], %50 {strides = array<i32>} : memref<8x8xf32, #tpu.memory_space<vmem>>, vector<8x8xf32>,
    return
  }
  func.func @transform_0(%arg0: i32) -> (i32, i32) {
    %c0_i32 = arith.constant 0 : i32
    %c0_i32_0 = arith.constant 0 : i32
    return %arg0, %c0_i32 : i32, i32
  }
  func.func @transform_1(%arg0: i32) -> (i32, i32) {
    %c0_i32 = arith.constant 0 : i32
    %c0_i32_0 = arith.constant 0 : i32
    %c0_i32_1 = arith.constant 0 : i32
    return %c0_i32, %c0_i32_0 : i32, i32
  }
  func.func @transform_2(%arg0: i32) -> (i32, i32) {
    %c0_i32 = arith.constant 0 : i32
    %c0_i32_0 = arith.constant 0 : i32
    return %c0_i32, %arg0 : i32, i32
  }
}

</mosaic_0001>

<llo_original>
// kernel: tpu_custom_call.1
$region0: #{tpu_custom_call.1}
  #allocation0 [shape = 'u32[]', space=smem, size = 0x4, offset = 0x4, fixed_abs, tag = 'smem constant byte address 0x4 - core index']
  #allocation1 [shape = 'u32[144,128]{1,0:T(1,128)}', space=vmem, size = 0x12000, scoped, tag = 'internal scratch']
  %s0 = inlined_call_operand.hbm [shape: f32[8,32], index: 0, kind: input, shape index: {}]
  %s1 = inlined_call_operand.hbm [shape: f32[328,128], index: 1, kind: input, shape index: {}]
  %s2 = inlined_call_operand.hbm [shape: f32[8,8], index: 2, kind: output, shape index: {}]
  %s3 = sld [smem:[#allocation0]]
  $region26: #{tpu_custom_call.1} parent=0
    _
  %s5 = ssub.s32 1, %s3
  %s6 = scalar_select 0, %s5, %s3
  $region1: #{tpu_custom_call.1} parent=0
    #allocation2 [shape = 'u8[4096]{0}', space=vmem, size = 0x1000, scoped, tag = 'input window, operand 0, single buffered']
    #allocation3 [shape = 's32[1]{0}', space=sflag, size = 0x4, scoped, tag = 'scoped memory for tpu_custom_call.1']
    #allocation4 [shape = 's32[1]{0}', space=sflag, size = 0x4, scoped, tag = 'scoped memory for tpu_custom_call.1']
    #allocation5 [shape = 'u8[167936]{0}', space=vmem, size = 0x29000, scoped, tag = 'input window, operand 1, single buffered']
    #allocation6 [shape = 's32[1]{0}', space=sflag, size = 0x4, scoped, tag = 'scoped memory for tpu_custom_call.1']
    #allocation7 [shape = 'u8[4096]{0}', space=vmem, size = 0x1000, scoped, tag = 'output window, operand 0, single buffered']
    %7 = vsyncpa [#allocation3], 0
    %8 = vsyncpa [#allocation6], 0
    %9 = vsyncpa [#allocation4], 0
    // Predicated region
    $region2: #{tpu_custom_call.1} parent=1 // pred_check
      _
    $region3: #{tpu_custom_call.1} parent=1 // pred_check_branch
      %11 = sbr.rel (0) target = $region5
    $region4: #{tpu_custom_call.1} parent=1 // pred_region
      %s13 = ssub.s32 128, 128
      %14 = vsyncadd [#allocation3], %s13
      %s16 = sshll.u32 [#allocation2], 4
      %s17 = int_to_ptr.vmem [resolvable:$true] %s16
      %19 = dma.hbm_to_vmem [thread:$0]  %s0, 128, %s17, [#allocation3]
    $region5: #{tpu_custom_call.1} parent=1 // pred_fallthru
      _
    // Predicated region
    $region6: #{tpu_custom_call.1} parent=1 // pred_check
      _
    $region7: #{tpu_custom_call.1} parent=1 // pred_check_branch
      %21 = sbr.rel (0) target = $region9
    $region8: #{tpu_custom_call.1} parent=1 // pred_region
      %s23 = ssub.s32 5248, 5248
      %24 = vsyncadd [#allocation6], %s23
      %s25 = sshll.u32 [#allocation5], 4
      %s26 = int_to_ptr.vmem [resolvable:$true] %s25
      %31 = dma.hbm_to_vmem [thread:$0]  %s1, 5248, %s26, [#allocation6], 128, 128, 8
    $region9: #{tpu_custom_call.1} parent=1 // pred_fallthru
      _
    // Predicated region
    $region10: #{tpu_custom_call.1} parent=1 // pred_check
      _
    $region11: #{tpu_custom_call.1} parent=1 // pred_check_branch
      %33 = sbr.rel (0) target = $region13
    $region12: #{tpu_custom_call.1} parent=1 // pred_region
      %34 = dma.done [#allocation3], 128
    $region13: #{tpu_custom_call.1} parent=1 // pred_fallthru
      _
    // Predicated region
    $region14: #{tpu_custom_call.1} parent=1 // pred_check
      _
    $region15: #{tpu_custom_call.1} parent=1 // pred_check_branch
      %36 = sbr.rel (0) target = $region17
    $region16: #{tpu_custom_call.1} parent=1 // pred_region
      %37 = dma.done [#allocation6], 5248
    $region17: #{tpu_custom_call.1} parent=1 // pred_fallthru
      _
    %v38 = vld [vmem:[#allocation2] sm:$0xff]
    %v39 = vld [vmem:[#allocation5] sm:$0xff]
    %v40 = vld [vmem:[#allocation5 + $0x8] sm:$0xff]
    %v41 = vld [vmem:[#allocation5 + $0x10] sm:$0xff]
    %v42 = vld [vmem:[#allocation5 + $0x18] sm:$0xff]
    %v43 = vld [vmem:[#allocation5 + $0x20] sm:$0x1]
    %v44 = vlaneseq
    %v45 = vshrl.u32 %v44, 7
    %v46 = vsub.s32 0, %v45
    %v47 = vrot.slane %v43, %v46
    %vm48 = vcmask 261120
    %v50 = vsel %vm48, %v38, 0
    %52 = vmatprep.subr.mxu0 0.0
    %53 = vmatpush1.msra.mxu0 0.0
    %54 = vmatprep.subr.mxu0 0.0
    %55 = vmatpush1.msra.mxu0 0.0
    %56 = vmatprep.subr.mxu0 0.0
    %57 = vmatpush1.msra.mxu0 0.0
    %58 = vmatprep.subr.mxu0 0.0
    %59 = vmatpush1.msra.mxu0 0.0
    %60 = vmatprep.subr.mxu0 0.0
    %61 = vmatpush1.msra.mxu0 0.0
    %62 = vmatprep.subr.mxu0 0.0
    %63 = vmatpush1.msra.mxu0 0.0
    %64 = vmatprep.subr.mxu0 0.0
    %65 = vmatpush1.msra.mxu0 0.0
    %66 = vmatprep.subr.mxu0 0.0
    %67 = vmatpush1.msra.mxu0 0.0
    %68 = vmatprep.subr.mxu0 0.0
    %69 = vmatpush1.msra.mxu0 0.0
    %70 = vmatprep.subr.mxu0 0.0
    %71 = vmatpush1.msra.mxu0 0.0
    %72 = vmatprep.subr.mxu0 0.0
    %73 = vmatpush1.msra.mxu0 0.0
    %74 = vmatprep.subr.mxu0 0.0
    %75 = vmatpush1.msra.mxu0 0.0
    %76 = vmatprep.subr.mxu0 0.0
    %77 = vmatpush1.msra.mxu0 %v42
    %78 = vmatprep.subr.mxu0 0.0
    %79 = vmatpush1.msra.mxu0 %v41
    %80 = vmatprep.subr.mxu0 0.0
    %81 = vmatpush1.msra.mxu0 %v40
    %82 = vmatprep.subr.mxu0 0.0
    %83 = vmatpush1.msra.mxu0 %v39
    %84 = vmatprep.subr.mxu0 0.0
    %85 = vmatpush2.msra.mxu0 0.0
    %86 = vmatprep.subr.mxu0 0.0
    %87 = vmatpush2.msra.mxu0 0.0
    %88 = vmatprep.subr.mxu0 0.0
    %89 = vmatpush2.msra.mxu0 0.0
    %90 = vmatprep.subr.mxu0 0.0
    %91 = vmatpush2.msra.mxu0 0.0
    %92 = vmatprep.subr.mxu0 0.0
    %93 = vmatpush2.msra.mxu0 0.0
    %94 = vmatprep.subr.mxu0 0.0
    %95 = vmatpush2.msra.mxu0 0.0
    %96 = vmatprep.subr.mxu0 0.0
    %97 = vmatpush2.msra.mxu0 0.0
    %98 = vmatprep.subr.mxu0 0.0
    %99 = vmatpush2.msra.mxu0 0.0
    %100 = vmatprep.subr.mxu0 0.0
    %101 = vmatpush2.msra.mxu0 0.0
    %102 = vmatprep.subr.mxu0 0.0
    %103 = vmatpush2.msra.mxu0 0.0
    %104 = vmatprep.subr.mxu0 0.0
    %105 = vmatpush2.msra.mxu0 0.0
    %106 = vmatprep.subr.mxu0 0.0
    %107 = vmatpush2.msra.mxu0 0.0
    %108 = vmatprep.subr.mxu0 0.0
    %109 = vmatpush2.msra.mxu0 0.0
    %110 = vmatprep.subr.mxu0 0.0
    %111 = vmatpush2.msra.mxu0 0.0
    %112 = vmatprep.subr.mxu0 0.0
    %113 = vmatpush2.msra.mxu0 0.0
    %114 = vmatprep.subr.mxu0 0.0
    %115 = vmatpush2.msra.mxu0 0.0
    %116 = vmatprep.mubr.f32.mxu0 0.0
    %117 = vmatmul.mubr.f32.gmra.mxu0 %v50
    %v118 = vpop.f32.mrf.mxu0
    %v119 = vadd.f32 %v47, %v118
    %v120 = vpop.f32.mrf.mxu0
    %121 = vdwg.mxu0
    %vm122 = vcmp.ge.f32.partialorder %v119, 0.0
    %v123 = vmul.f32 %v119, 0.01
    %v124 = vsel %vm122, %v119, %v123
    %v125 = vld [vmem:[#allocation5 + $0x28] sm:$0xff]
    %v126 = vld [vmem:[#allocation5 + $0x30] sm:$0xff]
    %v127 = vld [vmem:[#allocation5 + $0x38] sm:$0xff]
    %v128 = vld [vmem:[#allocation5 + $0x40] sm:$0xff]
    %v129 = vld [vmem:[#allocation5 + $0x48] sm:$0xff]
    %v130 = vld [vmem:[#allocation5 + $0x50] sm:$0xff]
    %v131 = vld [vmem:[#allocation5 + $0x58] sm:$0xff]
    %v132 = vld [vmem:[#allocation5 + $0x60] sm:$0xff]
    %v133 = vld [vmem:[#allocation5 + $0x68] sm:$0xff]
    %v134 = vld [vmem:[#allocation5 + $0x70] sm:$0xff]
    %v135 = vld [vmem:[#allocation5 + $0x78] sm:$0xff]
    %v136 = vld [vmem:[#allocation5 + $0x80] sm:$0xff]
    %v137 = vld [vmem:[#allocation5 + $0x88] sm:$0xff]
    %v138 = vld [vmem:[#allocation5 + $0x90] sm:$0xff]
    %v139 = vld [vmem:[#allocation5 + $0x98] sm:$0xff]
    %v140 = vld [vmem:[#allocation5 + $0xa0] sm:$0xff]
    %v141 = vld [vmem:[#allocation5 + $0xa8] sm:$0x1]
    %v142 = vlaneseq
    %v143 = vshrl.u32 %v142, 7
    %v144 = vsub.s32 0, %v143
    %v145 = vrot.slane %v141, %v144
    %146 = vmatprep.subr.mxu0 0.0
    %147 = vmatpush1.msra.mxu0 %v140
    %148 = vmatprep.subr.mxu0 0.0
    %149 = vmatpush1.msra.mxu0 %v139
    %150 = vmatprep.subr.mxu0 0.0
    %151 = vmatpush1.msra.mxu0 %v138
    %152 = vmatprep.subr.mxu0 0.0
    %153 = vmatpush1.msra.mxu0 %v137
    %154 = vmatprep.subr.mxu0 0.0
    %155 = vmatpush1.msra.mxu0 %v136
    %156 = vmatprep.subr.mxu0 0.0
    %157 = vmatpush1.msra.mxu0 %v135
    %158 = vmatprep.subr.mxu0 0.0
    %159 = vmatpush1.msra.mxu0 %v134
    %160 = vmatprep.subr.mxu0 0.0
    %161 = vmatpush1.msra.mxu0 %v133
    %162 = vmatprep.subr.mxu0 0.0
    %163 = vmatpush1.msra.mxu0 %v132
    %164 = vmatprep.subr.mxu0 0.0
    %165 = vmatpush1.msra.mxu0 %v131
    %166 = vmatprep.subr.mxu0 0.0
    %167 = vmatpush1.msra.mxu0 %v130
    %168 = vmatprep.subr.mxu0 0.0
    %169 = vmatpush1.msra.mxu0 %v129
    %170 = vmatprep.subr.mxu0 0.0
    %171 = vmatpush1.msra.mxu0 %v128
    %172 = vmatprep.subr.mxu0 0.0
    %173 = vmatpush1.msra.mxu0 %v127
    %174 = vmatprep.subr.mxu0 0.0
    %175 = vmatpush1.msra.mxu0 %v126
    %176 = vmatprep.subr.mxu0 0.0
    %177 = vmatpush1.msra.mxu0 %v125
    %178 = vmatprep.subr.mxu0 0.0
    %179 = vmatpush2.msra.mxu0 0.0
    %180 = vmatprep.subr.mxu0 0.0
    %181 = vmatpush2.msra.mxu0 0.0
    %182 = vmatprep.subr.mxu0 0.0
    %183 = vmatpush2.msra.mxu0 0.0
    %184 = vmatprep.subr.mxu0 0.0
    %185 = vmatpush2.msra.mxu0 0.0
    %186 = vmatprep.subr.mxu0 0.0
    %187 = vmatpush2.msra.mxu0 0.0
    %188 = vmatprep.subr.mxu0 0.0
    %189 = vmatpush2.msra.mxu0 0.0
    %190 = vmatprep.subr.mxu0 0.0
    %191 = vmatpush2.msra.mxu0 0.0
    %192 = vmatprep.subr.mxu0 0.0
    %193 = vmatpush2.msra.mxu0 0.0
    %194 = vmatprep.subr.mxu0 0.0
    %195 = vmatpush2.msra.mxu0 0.0
    %196 = vmatprep.subr.mxu0 0.0
    %197 = vmatpush2.msra.mxu0 0.0
    %198 = vmatprep.subr.mxu0 0.0
    %199 = vmatpush2.msra.mxu0 0.0
    %200 = vmatprep.subr.mxu0 0.0
    %201 = vmatpush2.msra.mxu0 0.0
    %202 = vmatprep.subr.mxu0 0.0
    %203 = vmatpush2.msra.mxu0 0.0
    %204 = vmatprep.subr.mxu0 0.0
    %205 = vmatpush2.msra.mxu0 0.0
    %206 = vmatprep.subr.mxu0 0.0
    %207 = vmatpush2.msra.mxu0 0.0
    %208 = vmatprep.subr.mxu0 0.0
    %209 = vmatpush2.msra.mxu0 0.0
    %210 = vmatprep.mubr.f32.mxu0 0.0
    %211 = vmatmul.mubr.f32.gmra.mxu0 %v124
    %v212 = vpop.f32.mrf.mxu0
    %v213 = vadd.f32 %v145, %v212
    %v214 = vpop.f32.mrf.mxu0
    %215 = vdwg.mxu0
    %vm216 = vcmp.ge.f32.partialorder %v213, 0.0
    %v217 = vmul.f32 %v213, 0.01
    %v218 = vsel %vm216, %v213, %v217
    %v219 = vld [vmem:[#allocation5 + $0xb0] sm:$0xff]
    %v220 = vld [vmem:[#allocation5 + $0xb8] sm:$0xff]
    %v221 = vld [vmem:[#allocation5 + $0xc0] sm:$0xff]
    %v222 = vld [vmem:[#allocation5 + $0xc8] sm:$0xff]
    %v223 = vld [vmem:[#allocation5 + $0xd0] sm:$0xff]
    %v224 = vld [vmem:[#allocation5 + $0xd8] sm:$0xff]
    %v225 = vld [vmem:[#allocation5 + $0xe0] sm:$0xff]
    %v226 = vld [vmem:[#allocation5 + $0xe8] sm:$0xff]
    %v227 = vld [vmem:[#allocation5 + $0xf0] sm:$0xff]
    %v228 = vld [vmem:[#allocation5 + $0xf8] sm:$0xff]
    %v229 = vld [vmem:[#allocation5 + $0x100] sm:$0xff]
    %v230 = vld [vmem:[#allocation5 + $0x108] sm:$0xff]
    %v231 = vld [vmem:[#allocation5 + $0x110] sm:$0xff]
    %v232 = vld [vmem:[#allocation5 + $0x118] sm:$0xff]
    %v233 = vld [vmem:[#allocation5 + $0x120] sm:$0xff]
    %v234 = vld [vmem:[#allocation5 + $0x128] sm:$0xff]
    %v235 = vld [vmem:[#allocation5 + $0x130] sm:$0x1]
    %v236 = vlaneseq
    %v237 = vshrl.u32 %v236, 7
    %v238 = vsub.s32 0, %v237
    %v239 = vrot.slane %v235, %v238
    %240 = vmatprep.subr.mxu0 0.0
    %241 = vmatpush1.msra.mxu0 %v234
    %242 = vmatprep.subr.mxu0 0.0
    %243 = vmatpush1.msra.mxu0 %v233
    %244 = vmatprep.subr.mxu0 0.0
    %245 = vmatpush1.msra.mxu0 %v232
    %246 = vmatprep.subr.mxu0 0.0
    %247 = vmatpush1.msra.mxu0 %v231
    %248 = vmatprep.subr.mxu0 0.0
    %249 = vmatpush1.msra.mxu0 %v230
    %250 = vmatprep.subr.mxu0 0.0
    %251 = vmatpush1.msra.mxu0 %v229
    %252 = vmatprep.subr.mxu0 0.0
    %253 = vmatpush1.msra.mxu0 %v228
    %254 = vmatprep.subr.mxu0 0.0
    %255 = vmatpush1.msra.mxu0 %v227
    %256 = vmatprep.subr.mxu0 0.0
    %257 = vmatpush1.msra.mxu0 %v226
    %258 = vmatprep.subr.mxu0 0.0
    %259 = vmatpush1.msra.mxu0 %v225
    %260 = vmatprep.subr.mxu0 0.0
    %261 = vmatpush1.msra.mxu0 %v224
    %262 = vmatprep.subr.mxu0 0.0
    %263 = vmatpush1.msra.mxu0 %v223
    %264 = vmatprep.subr.mxu0 0.0
    %265 = vmatpush1.msra.mxu0 %v222
    %266 = vmatprep.subr.mxu0 0.0
    %267 = vmatpush1.msra.mxu0 %v221
    %268 = vmatprep.subr.mxu0 0.0
    %269 = vmatpush1.msra.mxu0 %v220
    %270 = vmatprep.subr.mxu0 0.0
    %271 = vmatpush1.msra.mxu0 %v219
    %272 = vmatprep.subr.mxu0 0.0
    %273 = vmatpush2.msra.mxu0 0.0
    %274 = vmatprep.subr.mxu0 0.0
    %275 = vmatpush2.msra.mxu0 0.0
    %276 = vmatprep.subr.mxu0 0.0
    %277 = vmatpush2.msra.mxu0 0.0
    %278 = vmatprep.subr.mxu0 0.0
    %279 = vmatpush2.msra.mxu0 0.0
    %280 = vmatprep.subr.mxu0 0.0
    %281 = vmatpush2.msra.mxu0 0.0
    %282 = vmatprep.subr.mxu0 0.0
    %283 = vmatpush2.msra.mxu0 0.0
    %284 = vmatprep.subr.mxu0 0.0
    %285 = vmatpush2.msra.mxu0 0.0
    %286 = vmatprep.subr.mxu0 0.0
    %287 = vmatpush2.msra.mxu0 0.0
    %288 = vmatprep.subr.mxu0 0.0
    %289 = vmatpush2.msra.mxu0 0.0
    %290 = vmatprep.subr.mxu0 0.0
    %291 = vmatpush2.msra.mxu0 0.0
    %292 = vmatprep.subr.mxu0 0.0
    %293 = vmatpush2.msra.mxu0 0.0
    %294 = vmatprep.subr.mxu0 0.0
    %295 = vmatpush2.msra.mxu0 0.0
    %296 = vmatprep.subr.mxu0 0.0
    %297 = vmatpush2.msra.mxu0 0.0
    %298 = vmatprep.subr.mxu0 0.0
    %299 = vmatpush2.msra.mxu0 0.0
    %300 = vmatprep.subr.mxu0 0.0
    %301 = vmatpush2.msra.mxu0 0.0
    %302 = vmatprep.subr.mxu0 0.0
    %303 = vmatpush2.msra.mxu0 0.0
    %304 = vmatprep.mubr.f32.mxu0 0.0
    %305 = vmatmul.mubr.f32.gmra.mxu0 %v218
    %v306 = vpop.f32.mrf.mxu0
    %v307 = vadd.f32 %v239, %v306
    %v308 = vpop.f32.mrf.mxu0
    %309 = vdwg.mxu0
    %vm310 = vcmp.ge.f32.partialorder %v307, 0.0
    %v311 = vmul.f32 %v307, 0.01
    %v312 = vsel %vm310, %v307, %v311
    %v313 = vld [vmem:[#allocation5 + $0x138] sm:$0xff]
    %v314 = vld [vmem:[#allocation5 + $0x140] sm:$0xff]
    %316 = vset.pattern.permute.xlu0 0
    %317 = vperm.xlu0 %316, %v314
    %v318 = vpop.permute.xlu0 %317
    %320 = vmatprep.subr.mxu0 0.0
    %321 = vmatpush1.xpose.msra.mxu0 0.0
    %322 = vmatprep.subr.mxu0 0.0
    %323 = vmatpush1.xpose.msra.mxu0 0.0
    %324 = vmatprep.subr.mxu0 0.0
    %325 = vmatpush1.xpose.msra.mxu0 0.0
    %326 = vmatprep.subr.mxu0 0.0
    %327 = vmatpush1.xpose.msra.mxu0 0.0
    %328 = vmatprep.subr.mxu0 0.0
    %329 = vmatpush1.xpose.msra.mxu0 0.0
    %330 = vmatprep.subr.mxu0 0.0
    %331 = vmatpush1.xpose.msra.mxu0 0.0
    %332 = vmatprep.subr.mxu0 0.0
    %333 = vmatpush1.xpose.msra.mxu0 0.0
    %334 = vmatprep.subr.mxu0 0.0
    %335 = vmatpush1.xpose.msra.mxu0 0.0
    %336 = vmatprep.subr.mxu0 0.0
    %337 = vmatpush1.xpose.msra.mxu0 0.0
    %338 = vmatprep.subr.mxu0 0.0
    %339 = vmatpush1.xpose.msra.mxu0 0.0
    %340 = vmatprep.subr.mxu0 0.0
    %341 = vmatpush1.xpose.msra.mxu0 0.0
    %342 = vmatprep.subr.mxu0 0.0
    %343 = vmatpush1.xpose.msra.mxu0 0.0
    %344 = vmatprep.subr.mxu0 0.0
    %345 = vmatpush1.xpose.msra.mxu0 0.0
    %346 = vmatprep.subr.mxu0 0.0
    %347 = vmatpush1.xpose.msra.mxu0 0.0
    %348 = vmatprep.subr.mxu0 0.0
    %349 = vmatpush1.xpose.msra.mxu0 0.0
    %350 = vmatprep.subr.mxu0 0.0
    %351 = vmatpush1.xpose.msra.mxu0 %v312
    %352 = vmatprep.subr.mxu0 0.0
    %353 = vmatpush2.xpose.msra.mxu0 0.0
    %354 = vmatprep.subr.mxu0 0.0
    %355 = vmatpush2.xpose.msra.mxu0 0.0
    %356 = vmatprep.subr.mxu0 0.0
    %357 = vmatpush2.xpose.msra.mxu0 0.0
    %358 = vmatprep.subr.mxu0 0.0
    %359 = vmatpush2.xpose.msra.mxu0 0.0
    %360 = vmatprep.subr.mxu0 0.0
    %361 = vmatpush2.xpose.msra.mxu0 0.0
    %362 = vmatprep.subr.mxu0 0.0
    %363 = vmatpush2.xpose.msra.mxu0 0.0
    %364 = vmatprep.subr.mxu0 0.0
    %365 = vmatpush2.xpose.msra.mxu0 0.0
    %366 = vmatprep.subr.mxu0 0.0
    %367 = vmatpush2.xpose.msra.mxu0 0.0
    %368 = vmatprep.subr.mxu0 0.0
    %369 = vmatpush2.xpose.msra.mxu0 0.0
    %370 = vmatprep.subr.mxu0 0.0
    %371 = vmatpush2.xpose.msra.mxu0 0.0
    %372 = vmatprep.subr.mxu0 0.0
    %373 = vmatpush2.xpose.msra.mxu0 0.0
    %374 = vmatprep.subr.mxu0 0.0
    %375 = vmatpush2.xpose.msra.mxu0 0.0
    %376 = vmatprep.subr.mxu0 0.0
    %377 = vmatpush2.xpose.msra.mxu0 0.0
    %378 = vmatprep.subr.mxu0 0.0
    %379 = vmatpush2.xpose.msra.mxu0 0.0
    %380 = vmatprep.subr.mxu0 0.0
    %381 = vmatpush2.xpose.msra.mxu0 0.0
    %382 = vmatprep.subr.mxu0 0.0
    %383 = vmatpush2.xpose.msra.mxu0 0.0
    %384 = vmatprep.mubr.f32.mxu0 0.0
    %385 = vmatmul.mubr.f32.gmra.mxu0 %v313
    %v386 = vpop.f32.mrf.mxu0
    %v387 = vadd.f32 %v318, %v386
    %v388 = vpop.f32.mrf.mxu0
    %389 = vdwg.mxu0
    %v390 = vlaneseq
    %v391 = vshrl.u32 %v390, 7
    %vm392 = vcmp.lt.s32.totalorder %v391, 4
    %v393 = vtanh.pop %v387
    %v394 = vmul.f32 %v393, 2.0
    %vm395 = vcmp.gt.f32.partialorder %v387, 20.0
    %v396 = vmin.f32 %v387, 20.0
    %v397 = vmul.f32 %v396, 1.442695
    %v398 = vpow.pop %v397
    %v399 = vadd.f32 %v398, 1.0
    %v400 = vlog2.pop %v399
    %v401 = vmul.f32 %v400, 0.6931472
    %v402 = vmul.f32 -0.5, %v398
    %v403 = vadd.f32 %v402, 1.0
    %v404 = vmul.f32 %v403, %v398
    %v405 = vand.u32 2147483647, %v398
    %vm406 = vcmp.lt.f32.partialorder %v405, 0.0004427343
    %v407 = vsel %vm406, %v404, %v401
    %v408 = vsel %vm395, %v387, %v407
    %v409 = vsel %vm392, %v394, %v408
    %vm410 = vcmask 64512
    %411 = vst.msk [vmem:[#allocation7] sm:$0xff] %vm410, %v409
    // Predicated region
    $region18: #{tpu_custom_call.1} parent=1 // pred_check
      _
    $region19: #{tpu_custom_call.1} parent=1 // pred_check_branch
      %413 = sbr.rel (0) target = $region21
    $region20: #{tpu_custom_call.1} parent=1 // pred_region
      %s415 = ssub.s32 128, 128
      %416 = vsyncadd [#allocation4], %s415
      %s418 = sshll.u32 [#allocation7], 4
      %s419 = int_to_ptr.vmem [resolvable:$true] %s418
      %421 = dma.vmem_to_hbm [thread:$0]  %s419, 128, %s2, [#allocation4]
    $region21: #{tpu_custom_call.1} parent=1 // pred_fallthru
      _
    // Predicated region
    $region22: #{tpu_custom_call.1} parent=1 // pred_check
      _
    $region23: #{tpu_custom_call.1} parent=1 // pred_check_branch
      %423 = sbr.rel (0) target = $region25
    $region24: #{tpu_custom_call.1} parent=1 // pred_region
      %424 = dma.done [#allocation4], 128
    $region25: #{tpu_custom_call.1} parent=1 // pred_fallthru
      _
    %425 = vsyncpa [#allocation3], 1
    %426 = vsyncpa [#allocation6], 1
    %427 = vsyncpa [#allocation4], 1

</llo_original>
